<compile_context>
chip_gen: v7x
topology: tpu7x:2x2x1
jax: 0.10.0
libtpu: 0.0.40
codegen_flags: <defaults>
</compile_context>

<pallas_src>
import functools

import jax
import jax.numpy as jnp
from jax.experimental import pallas as pl
from jax.experimental.pallas import tpu as pltpu


def _round_up(x, m):
    return ((x + m - 1) // m) * m


def _cmf_kernel(n_inputs, rank, *refs):
    """refs = (X_1..X_N, W_1..W_N, U, b, Z_out); W_i = [V_i^T ; Um_i^T] : [2R, d_i]."""
    x_refs = refs[:n_inputs]
    w_refs = refs[n_inputs:2 * n_inputs]
    u_ref = refs[2 * n_inputs]
    b_ref = refs[2 * n_inputs + 1]
    z_ref = refs[2 * n_inputs + 2]

    # One fused MXU matmul per input: rows [:R] are the additive (VX) contribution,
    # rows [R:] the Hadamard (UX) contribution. Initialize accumulators from the
    # first input — no zeros/ones materialization.
    y = jnp.dot(w_refs[0][...], x_refs[0][...], preferred_element_type=jnp.float32)
    vx = y[:rank, :]
    ux = y[rank:, :]
    for i in range(1, n_inputs):
        y = jnp.dot(w_refs[i][...], x_refs[i][...], preferred_element_type=jnp.float32)
        vx = vx + y[:rank, :]
        ux = ux * y[rank:, :]

    core = (vx + ux).astype(u_ref.dtype)  # bf16 on the fast path, f32 otherwise
    z = b_ref[...] + jnp.dot(u_ref[...], core, preferred_element_type=jnp.float32)
    z_ref[...] = z.astype(z_ref.dtype)


def cmf_forward(X_list, V_list, Um_list, U, b, *,
                compute_dtype=jnp.bfloat16, batch_tile=256):
    """Pallas CMF forward. X_i: [d_i, B]; V_i, Um_i: [d_i, R]; U: [d0, R]; b: [d0]."""
    n = len(X_list)
    d0, rank = U.shape
    batch = X_list[0].shape[1]
    d_list = [int(X.shape[0]) for X in X_list]

    # Lane-dense batch tiling: pad B to a multiple of 128 and grid over batch tiles.
    b_tile = int(min(batch_tile, _round_up(batch, 128)))
    b_tile = max(128, (b_tile // 128) * 128)
    padded_b = _round_up(batch, b_tile)
    num_tiles = padded_b // b_tile

    # Fused per-input weight: W_i = concat([V_i, Um_i], axis=1)^T -> [2R, d_i]
    # (single transpose folded into the concatenated weight build).
    W_list = [jnp.transpose(jnp.concatenate([V_list[i], Um_list[i]], axis=1))
              .astype(compute_dtype) for i in range(n)]
    U_c = U.astype(compute_dtype)
    b2d = b.reshape(d0, 1).astype(jnp.float32)  # bias stays f32, broadcast in-kernel

    Xp_list = []
    for X in X_list:
        Xc = X.astype(compute_dtype)
        if padded_b != batch:
            Xc = jnp.pad(Xc, ((0, 0), (0, padded_b - batch)))
        Xp_list.append(Xc)

    operands = Xp_list + W_list + [U_c, b2d]

    def resident(shape):
        return pl.BlockSpec(shape, lambda j: (0,) * len(shape))

    x_specs = [pl.BlockSpec((d, b_tile), lambda j: (0, j)) for d in d_list]
    w_specs = [resident(W.shape) for W in W_list]
    in_specs = x_specs + w_specs + [resident(U_c.shape), resident(b2d.shape)]
    out_spec = pl.BlockSpec((d0, b_tile), lambda j: (0, j))

    # Explicit VMEM budget: 2x (double-buffered) batch tiles + resident weights,
    # with headroom; capped well below v7x's 64 MiB physical VMEM.
    comp_bytes = jnp.dtype(compute_dtype).itemsize
    est = (2 * (sum(d_list) * b_tile * comp_bytes + d0 * b_tile * 4)
           + sum(2 * rank * d for d in d_list) * comp_bytes
           + d0 * rank * comp_bytes + d0 * 4)
    vmem_limit = int(min(48 * 2**20, max(8 * 2**20, 4 * est)))

    kernel = functools.partial(_cmf_kernel, n, rank)

    z_padded = pl.pallas_call(
        kernel,
        out_shape=jax.ShapeDtypeStruct((d0, padded_b), jnp.float32),
        grid_spec=pltpu.PrefetchScalarGridSpec(
            num_scalar_prefetch=0,
            grid=(num_tiles,),
            in_specs=in_specs,
            out_specs=out_spec,
        ),
        compiler_params=pltpu.CompilerParams(
            dimension_semantics=("parallel",),
            vmem_limit_bytes=vmem_limit,
        ),
    )(*operands)

    return z_padded[:, :batch] if padded_b != batch else z_padded


def cmf_reference(X_list, V_list, Um_list, U, b):
    """Pure-JAX reference mirroring the PyTorch forward (f32 math)."""
    batch = X_list[0].shape[1]
    bias = jnp.broadcast_to(b[:, None], (b.shape[0], batch))
    vx = 0.0
    for i, X in enumerate(X_list):
        vx = vx + V_list[i].T @ X
    ux = 1.0
    for i, X in enumerate(X_list):
        ux = ux * (Um_list[i].T @ X)
    return bias + U @ (vx + ux)


if __name__ == "__main__":
    # Small shapes: full_tensor_dims = [d0=32, d1=16, d2=24], rank=8, batch=8.
    full_tensor_dims = [32, 16, 24]
    rank = 8
    batch = 8
    n_inputs = len(full_tensor_dims) - 1

    key = jax.random.PRNGKey(0)
    keys = jax.random.split(key, 2 + 3 * n_inputs)

    def xavier(k, shape):
        fan_in = shape[-1] if len(shape) > 1 else shape[0]
        fan_out = shape[0]
        lim = jnp.sqrt(6.0 / (fan_in + fan_out))
        return jax.random.uniform(k, shape, jnp.float32, -lim, lim)

    # Deterministic parameter init (shapes per CMF.__init__).
    b = xavier(keys[0], (full_tensor_dims[0],))                        # [d0]
    U = xavier(keys[1], (full_tensor_dims[0], rank))                   # [d0, R]
    V_list = [xavier(keys[2 + i], (full_tensor_dims[i + 1], rank))     # [d_i, R]
              for i in range(n_inputs)]
    Um_list = [xavier(keys[2 + n_inputs + i], (full_tensor_dims[i + 1], rank))
               for i in range(n_inputs)]

    # Inputs X_i: [d_i, batch]  (batch_first=False convention).
    X_list = [jax.random.normal(keys[2 + 2 * n_inputs + i],
                                (full_tensor_dims[i + 1], batch), jnp.float32)
              for i in range(n_inputs)]

    # --- f32 compute path: bit-tight check vs. exact reference -----------------
    z_f32 = cmf_forward(X_list, V_list, Um_list, U, b, compute_dtype=jnp.float32)
    z_f32 = jax.block_until_ready(z_f32)
    z_ref = cmf_reference(X_list, V_list, Um_list, U, b)
    assert z_f32.shape == z_ref.shape, "shape mismatch"
    assert jnp.allclose(z_f32, z_ref, atol=1e-4, rtol=1e-4), "f32 path mismatch"

    # --- bf16 MXU path (fast path on v6e/v7x): check vs. bf16-quantized ref ----
    z_bf16 = cmf_forward(X_list, V_list, Um_list, U, b, compute_dtype=jnp.bfloat16)
    z_bf16 = jax.block_until_ready(z_bf16)

    def q(x):
        return x.astype(jnp.bfloat16).astype(jnp.float32)

    z_ref_q = cmf_reference([q(x) for x in X_list], [q(v) for v in V_list],
                            [q(u) for u in Um_list], q(U), b)
    assert jnp.allclose(z_bf16, z_ref_q, atol=5e-2, rtol=5e-2), "bf16 path mismatch"

    print("KERNEL_OK")
</pallas_src>

<mosaic_0001>
module attributes {stable_mosaic.version = 11 : i64} {
  func.func @_cmf_kernel(%arg0: i32, %arg1: memref<16x128xf32, #tpu.memory_space<vmem>>, %arg2: memref<24x128xf32, #tpu.memory_space<vmem>>, %arg3: memref<16x16xf32, #tpu.memory_space<vmem>>, %arg4: memref<16x24xf32, #tpu.memory_space<vmem>>, %arg5: memref<32x8xf32, #tpu.memory_space<vmem>>, %arg6: memref<32x1xf32, #tpu.memory_space<vmem>>, %arg7: memref<32x128xf32, #tpu.memory_space<vmem>>) attributes {dimension_semantics = [#tpu.dimension_semantics<parallel>], iteration_bounds = array<i64: 1>, scalar_prefetch = 0 : i64, scratch_operands = 0 : i64, tpu.core_type = #tpu.core_type<tc>, window_params = [{transform_indices = @transform_0, window_bounds = array<i64: 16, 128>}, {transform_indices = @transform_1, window_bounds = array<i64: 24, 128>}, {pipeline_mode = #tpu.pipeline_mode<synchronous>, transform_indices = @transform_2, window_bounds = array<i64: 16, 16>}, {pipeline_mode = #tpu.pipeline_mode<synchronous>, transform_indices = @transform_3, window_bounds = array<i64: 16, 24>}, {pipeline_mode = #tpu.pipeline_mode<synchronous>, transform_indices = @transform_4, window_bounds = array<i64: 32, 8>}, {pipeline_mode = #tpu.pipeline_mode<synchronous>, transform_indices = @transform_5, window_bounds = array<i64: 32, 1>}, {transform_indices = @transform_6, window_bounds = array<i64: 32, 128>}]} {
    %c0 = arith.constant 0 : index
    %c0_0 = arith.constant 0 : index
    %0 = vector.load %arg3[%c0, %c0_0] : memref<16x16xf32, #tpu.memory_space<vmem>>, vector<16x16xf32>
    %c0_1 = arith.constant 0 : index
    %c0_2 = arith.constant 0 : index
    %1 = vector.load %arg1[%c0_1, %c0_2] : memref<16x128xf32, #tpu.memory_space<vmem>>, vector<16x128xf32>
    %cst = arith.constant dense<0.000000e+00> : vector<16x128xf32>
    %2 = tpu.matmul %0, %1, %cst {dimension_numbers = #tpu.dot_dimension_numbers<[1], [0], [0], [1], [0, 0, 1, 1], [], []>} : vector<16x16xf32>, vector<16x128xf32>, vector<16x128xf32> -> vector<16x128xf32>
    %3 = vector.extract_strided_slice %2 {offsets = [0, 0], sizes = [8, 128], strides = [1, 1]} : vector<16x128xf32> to vector<8x128xf32>
    %4 = vector.extract_strided_slice %2 {offsets = [8, 0], sizes = [8, 128], strides = [1, 1]} : vector<16x128xf32> to vector<8x128xf32>
    %c0_3 = arith.constant 0 : index
    %c0_4 = arith.constant 0 : index
    %5 = vector.load %arg4[%c0_3, %c0_4] : memref<16x24xf32, #tpu.memory_space<vmem>>, vector<16x24xf32>
    %c0_5 = arith.constant 0 : index
    %c0_6 = arith.constant 0 : index
    %6 = vector.load %arg2[%c0_5, %c0_6] : memref<24x128xf32, #tpu.memory_space<vmem>>, vector<24x128xf32>
    %cst_7 = arith.constant dense<0.000000e+00> : vector<16x128xf32>
    %7 = tpu.matmul %5, %6, %cst_7 {dimension_numbers = #tpu.dot_dimension_numbers<[1], [0], [0], [1], [0, 0, 1, 1], [], []>} : vector<16x24xf32>, vector<24x128xf32>, vector<16x128xf32> -> vector<16x128xf32>
    %8 = vector.extract_strided_slice %7 {offsets = [0, 0], sizes = [8, 128], strides = [1, 1]} : vector<16x128xf32> to vector<8x128xf32>
    %9 = arith.addf %3, %8 : vector<8x128xf32>
    %10 = vector.extract_strided_slice %7 {offsets = [8, 0], sizes = [8, 128], strides = [1, 1]} : vector<16x128xf32> to vector<8x128xf32>
    %11 = arith.mulf %4, %10 : vector<8x128xf32>
    %12 = arith.addf %9, %11 : vector<8x128xf32>
    %c0_8 = arith.constant 0 : index
    %c0_9 = arith.constant 0 : index
    %13 = vector.load %arg6[%c0_8, %c0_9] : memref<32x1xf32, #tpu.memory_space<vmem>>, vector<32x1xf32>
    %c0_10 = arith.constant 0 : index
    %c0_11 = arith.constant 0 : index
    %14 = vector.load %arg5[%c0_10, %c0_11] : memref<32x8xf32, #tpu.memory_space<vmem>>, vector<32x8xf32>
    %cst_12 = arith.constant dense<0.000000e+00> : vector<32x128xf32>
    %15 = tpu.matmul %14, %12, %cst_12 {dimension_numbers = #tpu.dot_dimension_numbers<[1], [0], [0], [1], [0, 0, 1, 1], [], []>} : vector<32x8xf32>, vector<8x128xf32>, vector<32x128xf32> -> vector<32x128xf32>
    %16 = vector.broadcast %13 : vector<32x1xf32> to vector<32x128xf32>
    %17 = arith.addf %16, %15 : vector<32x128xf32>
    %c0_13 = arith.constant 0 : index
    %c0_14 = arith.constant 0 : index
    %18 = vector.load %arg7[%c0_13, %c0_14] : memref<32x128xf32, #tpu.memory_space<vmem>>, vector<32x128xf32>
    tpu.vector_store %arg7[%c0_13, %c0_14], %17 {strides = array<i32>} : memref<32x128xf32, #tpu.memory_space<vmem>>, vector<32x128xf32>,
    return
  }
  func.func @transform_0(%arg0: i32) -> (i32, i32) {
    %c0_i32 = arith.constant 0 : i32
    %c0_i32_0 = arith.constant 0 : i32
    return %c0_i32, %arg0 : i32, i32
  }
  func.func @transform_1(%arg0: i32) -> (i32, i32) {
    %c0_i32 = arith.constant 0 : i32
    %c0_i32_0 = arith.constant 0 : i32
    return %c0_i32, %arg0 : i32, i32
  }
  func.func @transform_2(%arg0: i32) -> (i32, i32) {
    %c0_i32 = arith.constant 0 : i32
    %c0_i32_0 = arith.constant 0 : i32
    %c0_i32_1 = arith.constant 0 : i32
    return %c0_i32, %c0_i32_0 : i32, i32
  }
  func.func @transform_3(%arg0: i32) -> (i32, i32) {
    %c0_i32 = arith.constant 0 : i32
    %c0_i32_0 = arith.constant 0 : i32
    %c0_i32_1 = arith.constant 0 : i32
    return %c0_i32, %c0_i32_0 : i32, i32
  }
  func.func @transform_4(%arg0: i32) -> (i32, i32) {
    %c0_i32 = arith.constant 0 : i32
    %c0_i32_0 = arith.constant 0 : i32
    %c0_i32_1 = arith.constant 0 : i32
    return %c0_i32, %c0_i32_0 : i32, i32
  }
  func.func @transform_5(%arg0: i32) -> (i32, i32) {
    %c0_i32 = arith.constant 0 : i32
    %c0_i32_0 = arith.constant 0 : i32
    %c0_i32_1 = arith.constant 0 : i32
    return %c0_i32, %c0_i32_0 : i32, i32
  }
  func.func @transform_6(%arg0: i32) -> (i32, i32) {
    %c0_i32 = arith.constant 0 : i32
    %c0_i32_0 = arith.constant 0 : i32
    return %c0_i32, %arg0 : i32, i32
  }
}

</mosaic_0001>

<llo_original>
// kernel: tpu_custom_call.1
$region0: #{tpu_custom_call.1}
  #allocation0 [shape = 'u32[]', space=smem, size = 0x4, offset = 0x4, fixed_abs, tag = 'smem constant byte address 0x4 - core index']
  #allocation1 [shape = 'u32[144,128]{1,0:T(1,128)}', space=vmem, size = 0x12000, scoped, tag = 'internal scratch']
  %s0 = inlined_call_operand.vmem [shape: f32[16,128], index: 0, kind: input, shape index: {}]
  %s1 = inlined_call_operand.vmem [shape: f32[24,128], index: 1, kind: input, shape index: {}]
  %s2 = inlined_call_operand.vmem [shape: f32[16,16], index: 2, kind: input, shape index: {}]
  %s3 = inlined_call_operand.vmem [shape: f32[16,24], index: 3, kind: input, shape index: {}]
  %s4 = inlined_call_operand.vmem [shape: f32[32,8], index: 4, kind: input, shape index: {}]
  %s5 = inlined_call_operand.vmem [shape: f32[32,1], index: 5, kind: input, shape index: {}]
  %s6 = inlined_call_operand.hbm [shape: f32[32,128], index: 6, kind: output, shape index: {}]
  %s7 = sld [smem:[#allocation0]]
  $region34: #{tpu_custom_call.1} parent=0
    _
  %s9 = ssub.s32 1, %s7
  %s10 = scalar_select 0, %s9, %s7
  $region1: #{tpu_custom_call.1} parent=0
    #allocation2 [shape = 'u8[16384]{0}', space=vmem, size = 0x4000, scoped, tag = 'output window, operand 0, single buffered']
    #allocation3 [shape = 's32[1]{0}', space=sflag, size = 0x4, scoped, tag = 'scoped memory for tpu_custom_call.1']
    %11 = vsyncpa [#allocation3], 0
    // Predicated region
    $region2: #{tpu_custom_call.1} parent=1 // pred_check
      _
    $region3: #{tpu_custom_call.1} parent=1 // pred_check_branch
      %13 = sbr.rel (0) target = $region5
    $region4: #{tpu_custom_call.1} parent=1 // pred_region
      _
    $region5: #{tpu_custom_call.1} parent=1 // pred_fallthru
      _
    // Predicated region
    $region6: #{tpu_custom_call.1} parent=1 // pred_check
      _
    $region7: #{tpu_custom_call.1} parent=1 // pred_check_branch
      %15 = sbr.rel (0) target = $region9
    $region8: #{tpu_custom_call.1} parent=1 // pred_region
      _
    $region9: #{tpu_custom_call.1} parent=1 // pred_fallthru
      _
    // Predicated region
    $region10: #{tpu_custom_call.1} parent=1 // pred_check
      _
    $region11: #{tpu_custom_call.1} parent=1 // pred_check_branch
      %17 = sbr.rel (0) target = $region13
    $region12: #{tpu_custom_call.1} parent=1 // pred_region
      _
    $region13: #{tpu_custom_call.1} parent=1 // pred_fallthru
      _
    // Predicated region
    $region14: #{tpu_custom_call.1} parent=1 // pred_check
      _
    $region15: #{tpu_custom_call.1} parent=1 // pred_check_branch
      %19 = sbr.rel (0) target = $region17
    $region16: #{tpu_custom_call.1} parent=1 // pred_region
      _
    $region17: #{tpu_custom_call.1} parent=1 // pred_fallthru
      _
    // Predicated region
    $region18: #{tpu_custom_call.1} parent=1 // pred_check
      _
    $region19: #{tpu_custom_call.1} parent=1 // pred_check_branch
      %21 = sbr.rel (0) target = $region21
    $region20: #{tpu_custom_call.1} parent=1 // pred_region
      _
    $region21: #{tpu_custom_call.1} parent=1 // pred_fallthru
      _
    // Predicated region
    $region22: #{tpu_custom_call.1} parent=1 // pred_check
      _
    $region23: #{tpu_custom_call.1} parent=1 // pred_check_branch
      %23 = sbr.rel (0) target = $region25
    $region24: #{tpu_custom_call.1} parent=1 // pred_region
      _
    $region25: #{tpu_custom_call.1} parent=1 // pred_fallthru
      _
    %v24 = vld [vmem:[%s2] sm:$0xff]
    %v25 = vld [vmem:[%s2 + $0x8] sm:$0xff]
    %v26 = vld [vmem:[%s0] sm:$0xff]
    %v27 = vld [vmem:[%s0 + $0x8] sm:$0xff]
    %vm28 = vcmask 130048
    %v30 = vsel %vm28, %v24, 0
    %v33 = vsel %vm28, %v25, 0
    %35 = vmatprep.subr.mxu0 0.0
    %36 = vmatpush1.msra.mxu0 %v26
    %37 = vmatprep.subr.mxu0 0.0
    %38 = vmatpush1.msra.mxu0 %v27
    %39 = vmatprep.subr.mxu0 0.0
    %40 = vmatpush1.msra.mxu0 0.0
    %41 = vmatprep.subr.mxu0 0.0
    %42 = vmatpush1.msra.mxu0 0.0
    %43 = vmatprep.subr.mxu0 0.0
    %44 = vmatpush1.msra.mxu0 0.0
    %45 = vmatprep.subr.mxu0 0.0
    %46 = vmatpush1.msra.mxu0 0.0
    %47 = vmatprep.subr.mxu0 0.0
    %48 = vmatpush1.msra.mxu0 0.0
    %49 = vmatprep.subr.mxu0 0.0
    %50 = vmatpush1.msra.mxu0 0.0
    %51 = vmatprep.subr.mxu0 0.0
    %52 = vmatpush1.msra.mxu0 0.0
    %53 = vmatprep.subr.mxu0 0.0
    %54 = vmatpush1.msra.mxu0 0.0
    %55 = vmatprep.subr.mxu0 0.0
    %56 = vmatpush1.msra.mxu0 0.0
    %57 = vmatprep.subr.mxu0 0.0
    %58 = vmatpush1.msra.mxu0 0.0
    %59 = vmatprep.subr.mxu0 0.0
    %60 = vmatpush1.msra.mxu0 0.0
    %61 = vmatprep.subr.mxu0 0.0
    %62 = vmatpush1.msra.mxu0 0.0
    %63 = vmatprep.subr.mxu0 0.0
    %64 = vmatpush1.msra.mxu0 0.0
    %65 = vmatprep.subr.mxu0 0.0
    %66 = vmatpush1.msra.mxu0 0.0
    %67 = vmatprep.subr.mxu0 0.0
    %68 = vmatpush1.msra.mxu0 0.0
    %69 = vmatprep.subr.mxu0 0.0
    %70 = vmatpush1.msra.mxu0 0.0
    %71 = vmatprep.subr.mxu0 0.0
    %72 = vmatpush1.msra.mxu0 0.0
    %73 = vmatprep.subr.mxu0 0.0
    %74 = vmatpush1.msra.mxu0 0.0
    %75 = vmatprep.subr.mxu0 0.0
    %76 = vmatpush1.msra.mxu0 0.0
    %77 = vmatprep.subr.mxu0 0.0
    %78 = vmatpush1.msra.mxu0 0.0
    %79 = vmatprep.subr.mxu0 0.0
    %80 = vmatpush1.msra.mxu0 0.0
    %81 = vmatprep.subr.mxu0 0.0
    %82 = vmatpush1.msra.mxu0 0.0
    %83 = vmatprep.subr.mxu0 0.0
    %84 = vmatpush1.msra.mxu0 0.0
    %85 = vmatprep.subr.mxu0 0.0
    %86 = vmatpush1.msra.mxu0 0.0
    %87 = vmatprep.subr.mxu0 0.0
    %88 = vmatpush1.msra.mxu0 0.0
    %89 = vmatprep.subr.mxu0 0.0
    %90 = vmatpush1.msra.mxu0 0.0
    %91 = vmatprep.subr.mxu0 0.0
    %92 = vmatpush1.msra.mxu0 0.0
    %93 = vmatprep.subr.mxu0 0.0
    %94 = vmatpush1.msra.mxu0 0.0
    %95 = vmatprep.subr.mxu0 0.0
    %96 = vmatpush1.msra.mxu0 0.0
    %97 = vmatprep.subr.mxu0 0.0
    %98 = vmatpush1.msra.mxu0 0.0
    %99 = vmatprep.mubr.f32.mxu0 0.0
    %100 = vmatmul.mubr.f32.gmra.mrb[0].mxu0 %v30
    %v101 = vpop.f32.mrb[0].mxu0
    %v102 = vadd.f32 0.0, %v101
    %v103 = vpop.f32.mrb[0].mxu0
    %104 = vmatprep.mubr.f32.mxu0 0.0
    %105 = vmatmul.mubr.f32.gmra.mrb[0].mxu0 %v33
    %v106 = vpop.f32.mrb[0].mxu0
    %v107 = vadd.f32 0.0, %v106
    %v108 = vpop.f32.mrb[0].mxu0
    %109 = vdwg.mxu0
    %v110 = vld [vmem:[%s3] sm:$0xff]
    %v111 = vld [vmem:[%s3 + $0x8] sm:$0xff]
    %v112 = vld [vmem:[%s1] sm:$0xff]
    %v113 = vld [vmem:[%s1 + $0x8] sm:$0xff]
    %v114 = vld [vmem:[%s1 + $0x10] sm:$0xff]
    %vm115 = vcmask 195584
    %v117 = vsel %vm115, %v110, 0
    %v120 = vsel %vm115, %v111, 0
    %122 = vmatprep.subr.mxu0 0.0
    %123 = vmatpush1.msra.mxu0 %v112
    %124 = vmatprep.subr.mxu0 0.0
    %125 = vmatpush1.msra.mxu0 %v113
    %126 = vmatprep.subr.mxu0 0.0
    %127 = vmatpush1.msra.mxu0 %v114
    %128 = vmatprep.subr.mxu0 0.0
    %129 = vmatpush1.msra.mxu0 0.0
    %130 = vmatprep.subr.mxu0 0.0
    %131 = vmatpush1.msra.mxu0 0.0
    %132 = vmatprep.subr.mxu0 0.0
    %133 = vmatpush1.msra.mxu0 0.0
    %134 = vmatprep.subr.mxu0 0.0
    %135 = vmatpush1.msra.mxu0 0.0
    %136 = vmatprep.subr.mxu0 0.0
    %137 = vmatpush1.msra.mxu0 0.0
    %138 = vmatprep.subr.mxu0 0.0
    %139 = vmatpush1.msra.mxu0 0.0
    %140 = vmatprep.subr.mxu0 0.0
    %141 = vmatpush1.msra.mxu0 0.0
    %142 = vmatprep.subr.mxu0 0.0
    %143 = vmatpush1.msra.mxu0 0.0
    %144 = vmatprep.subr.mxu0 0.0
    %145 = vmatpush1.msra.mxu0 0.0
    %146 = vmatprep.subr.mxu0 0.0
    %147 = vmatpush1.msra.mxu0 0.0
    %148 = vmatprep.subr.mxu0 0.0
    %149 = vmatpush1.msra.mxu0 0.0
    %150 = vmatprep.subr.mxu0 0.0
    %151 = vmatpush1.msra.mxu0 0.0
    %152 = vmatprep.subr.mxu0 0.0
    %153 = vmatpush1.msra.mxu0 0.0
    %154 = vmatprep.subr.mxu0 0.0
    %155 = vmatpush1.msra.mxu0 0.0
    %156 = vmatprep.subr.mxu0 0.0
    %157 = vmatpush1.msra.mxu0 0.0
    %158 = vmatprep.subr.mxu0 0.0
    %159 = vmatpush1.msra.mxu0 0.0
    %160 = vmatprep.subr.mxu0 0.0
    %161 = vmatpush1.msra.mxu0 0.0
    %162 = vmatprep.subr.mxu0 0.0
    %163 = vmatpush1.msra.mxu0 0.0
    %164 = vmatprep.subr.mxu0 0.0
    %165 = vmatpush1.msra.mxu0 0.0
    %166 = vmatprep.subr.mxu0 0.0
    %167 = vmatpush1.msra.mxu0 0.0
    %168 = vmatprep.subr.mxu0 0.0
    %169 = vmatpush1.msra.mxu0 0.0
    %170 = vmatprep.subr.mxu0 0.0
    %171 = vmatpush1.msra.mxu0 0.0
    %172 = vmatprep.subr.mxu0 0.0
    %173 = vmatpush1.msra.mxu0 0.0
    %174 = vmatprep.subr.mxu0 0.0
    %175 = vmatpush1.msra.mxu0 0.0
    %176 = vmatprep.subr.mxu0 0.0
    %177 = vmatpush1.msra.mxu0 0.0
    %178 = vmatprep.subr.mxu0 0.0
    %179 = vmatpush1.msra.mxu0 0.0
    %180 = vmatprep.subr.mxu0 0.0
    %181 = vmatpush1.msra.mxu0 0.0
    %182 = vmatprep.subr.mxu0 0.0
    %183 = vmatpush1.msra.mxu0 0.0
    %184 = vmatprep.subr.mxu0 0.0
    %185 = vmatpush1.msra.mxu0 0.0
    %186 = vmatprep.mubr.f32.mxu0 0.0
    %187 = vmatmul.mubr.f32.gmra.mrb[0].mxu0 %v117
    %v188 = vpop.f32.mrb[0].mxu0
    %v189 = vadd.f32 0.0, %v188
    %v190 = vpop.f32.mrb[0].mxu0
    %191 = vmatprep.mubr.f32.mxu0 0.0
    %192 = vmatmul.mubr.f32.gmra.mrb[0].mxu0 %v120
    %v193 = vpop.f32.mrb[0].mxu0
    %v194 = vadd.f32 0.0, %v193
    %v195 = vpop.f32.mrb[0].mxu0
    %196 = vdwg.mxu0
    %v197 = vadd.f32 %v102, %v189
    %v198 = vmul.f32 %v107, %v194
    %v199 = vadd.f32 %v197, %v198
    %v200 = vld [vmem:[%s5] sm:$0xff]
    %v201 = vld [vmem:[%s5 + $0x8] sm:$0xff]
    %v202 = vld [vmem:[%s5 + $0x10] sm:$0xff]
    %v203 = vld [vmem:[%s5 + $0x18] sm:$0xff]
    %v204 = vld [vmem:[%s4] sm:$0xff]
    %v205 = vld [vmem:[%s4 + $0x8] sm:$0xff]
    %v206 = vld [vmem:[%s4 + $0x10] sm:$0xff]
    %v207 = vld [vmem:[%s4 + $0x18] sm:$0xff]
    %vm208 = vcmask 64512
    %v210 = vsel %vm208, %v204, 0
    %v213 = vsel %vm208, %v205, 0
    %v216 = vsel %vm208, %v206, 0
    %v219 = vsel %vm208, %v207, 0
    %221 = vmatprep.subr.mxu0 0.0
    %222 = vmatpush1.msra.mxu0 %v199
    %223 = vmatprep.subr.mxu0 0.0
    %224 = vmatpush1.msra.mxu0 0.0
    %225 = vmatprep.subr.mxu0 0.0
    %226 = vmatpush1.msra.mxu0 0.0
    %227 = vmatprep.subr.mxu0 0.0
    %228 = vmatpush1.msra.mxu0 0.0
    %229 = vmatprep.subr.mxu0 0.0
    %230 = vmatpush1.msra.mxu0 0.0
    %231 = vmatprep.subr.mxu0 0.0
    %232 = vmatpush1.msra.mxu0 0.0
    %233 = vmatprep.subr.mxu0 0.0
    %234 = vmatpush1.msra.mxu0 0.0
    %235 = vmatprep.subr.mxu0 0.0
    %236 = vmatpush1.msra.mxu0 0.0
    %237 = vmatprep.subr.mxu0 0.0
    %238 = vmatpush1.msra.mxu0 0.0
    %239 = vmatprep.subr.mxu0 0.0
    %240 = vmatpush1.msra.mxu0 0.0
    %241 = vmatprep.subr.mxu0 0.0
    %242 = vmatpush1.msra.mxu0 0.0
    %243 = vmatprep.subr.mxu0 0.0
    %244 = vmatpush1.msra.mxu0 0.0
    %245 = vmatprep.subr.mxu0 0.0
    %246 = vmatpush1.msra.mxu0 0.0
    %247 = vmatprep.subr.mxu0 0.0
    %248 = vmatpush1.msra.mxu0 0.0
    %249 = vmatprep.subr.mxu0 0.0
    %250 = vmatpush1.msra.mxu0 0.0
    %251 = vmatprep.subr.mxu0 0.0
    %252 = vmatpush1.msra.mxu0 0.0
    %253 = vmatprep.subr.mxu0 0.0
    %254 = vmatpush1.msra.mxu0 0.0
    %255 = vmatprep.subr.mxu0 0.0
    %256 = vmatpush1.msra.mxu0 0.0
    %257 = vmatprep.subr.mxu0 0.0
    %258 = vmatpush1.msra.mxu0 0.0
    %259 = vmatprep.subr.mxu0 0.0
    %260 = vmatpush1.msra.mxu0 0.0
    %261 = vmatprep.subr.mxu0 0.0
    %262 = vmatpush1.msra.mxu0 0.0
    %263 = vmatprep.subr.mxu0 0.0
    %264 = vmatpush1.msra.mxu0 0.0
    %265 = vmatprep.subr.mxu0 0.0
    %266 = vmatpush1.msra.mxu0 0.0
    %267 = vmatprep.subr.mxu0 0.0
    %268 = vmatpush1.msra.mxu0 0.0
    %269 = vmatprep.subr.mxu0 0.0
    %270 = vmatpush1.msra.mxu0 0.0
    %271 = vmatprep.subr.mxu0 0.0
    %272 = vmatpush1.msra.mxu0 0.0
    %273 = vmatprep.subr.mxu0 0.0
    %274 = vmatpush1.msra.mxu0 0.0
    %275 = vmatprep.subr.mxu0 0.0
    %276 = vmatpush1.msra.mxu0 0.0
    %277 = vmatprep.subr.mxu0 0.0
    %278 = vmatpush1.msra.mxu0 0.0
    %279 = vmatprep.subr.mxu0 0.0
    %280 = vmatpush1.msra.mxu0 0.0
    %281 = vmatprep.subr.mxu0 0.0
    %282 = vmatpush1.msra.mxu0 0.0
    %283 = vmatprep.subr.mxu0 0.0
    %284 = vmatpush1.msra.mxu0 0.0
    %285 = vmatprep.mubr.f32.mxu0 0.0
    %286 = vmatmul.mubr.f32.gmra.mrb[0].mxu0 %v210
    %v287 = vpop.f32.mrb[0].mxu0
    %v288 = vadd.f32 0.0, %v287
    %v289 = vpop.f32.mrb[0].mxu0
    %290 = vmatprep.mubr.f32.mxu0 0.0
    %291 = vmatmul.mubr.f32.gmra.mrb[0].mxu0 %v213
    %v292 = vpop.f32.mrb[0].mxu0
    %v293 = vadd.f32 0.0, %v292
    %v294 = vpop.f32.mrb[0].mxu0
    %295 = vmatprep.mubr.f32.mxu0 0.0
    %296 = vmatmul.mubr.f32.gmra.mrb[0].mxu0 %v216
    %v297 = vpop.f32.mrb[0].mxu0
    %v298 = vadd.f32 0.0, %v297
    %v299 = vpop.f32.mrb[0].mxu0
    %300 = vmatprep.mubr.f32.mxu0 0.0
    %301 = vmatmul.mubr.f32.gmra.mrb[0].mxu0 %v219
    %v302 = vpop.f32.mrb[0].mxu0
    %v303 = vadd.f32 0.0, %v302
    %v304 = vpop.f32.mrb[0].mxu0
    %305 = vdwg.mxu0
    %307 = vset.pattern.permute.xlu0 0
    %308 = vperm.xlu0 %307, %v200
    %v309 = vpop.permute.xlu0 %308
    %312 = vset.pattern.permute.xlu0 0
    %313 = vperm.xlu0 %312, %v201
    %v314 = vpop.permute.xlu0 %313
    %317 = vset.pattern.permute.xlu0 0
    %318 = vperm.xlu0 %317, %v202
    %v319 = vpop.permute.xlu0 %318
    %322 = vset.pattern.permute.xlu0 0
    %323 = vperm.xlu0 %322, %v203
    %v324 = vpop.permute.xlu0 %323
    %v326 = vadd.f32 %v309, %v288
    %v327 = vadd.f32 %v314, %v293
    %v328 = vadd.f32 %v319, %v298
    %v329 = vadd.f32 %v324, %v303
    %330 = vst [vmem:[#allocation2] sm:$0xff] %v326
    %331 = vst [vmem:[#allocation2 + $0x8] sm:$0xff] %v327
    %332 = vst [vmem:[#allocation2 + $0x10] sm:$0xff] %v328
    %333 = vst [vmem:[#allocation2 + $0x18] sm:$0xff] %v329
    // Predicated region
    $region26: #{tpu_custom_call.1} parent=1 // pred_check
      _
    $region27: #{tpu_custom_call.1} parent=1 // pred_check_branch
      %335 = sbr.rel (0) target = $region29
    $region28: #{tpu_custom_call.1} parent=1 // pred_region
      %s337 = ssub.s32 512, 512
      %338 = vsyncadd [#allocation3], %s337
      %s339 = sshll.u32 [#allocation2], 4
      %s340 = int_to_ptr.vmem [resolvable:$true] %s339
      %345 = dma.vmem_to_hbm [thread:$0]  %s340, 512, %s6, [#allocation3], 128, 128, 8
    $region29: #{tpu_custom_call.1} parent=1 // pred_fallthru
      _
    // Predicated region
    $region30: #{tpu_custom_call.1} parent=1 // pred_check
      _
    $region31: #{tpu_custom_call.1} parent=1 // pred_check_branch
      %347 = sbr.rel (0) target = $region33
    $region32: #{tpu_custom_call.1} parent=1 // pred_region
      %348 = dma.done [#allocation3], 512
    $region33: #{tpu_custom_call.1} parent=1 // pred_fallthru
      _
    %349 = vsyncpa [#allocation3], 1

</llo_original>
